<compile_context>
chip_gen: v7x
topology: tpu7x:2x2x1
jax: 0.10.0
libtpu: 0.0.40
codegen_flags: <defaults>
</compile_context>

<pallas_src>
import jax
import jax.numpy as jnp
from jax.experimental import pallas as pl
from jax.experimental.pallas import tpu as pltpu


_TARGET_TILE_BYTES = 2 << 20   # ~2 MiB per streamed tile -> near HBM roofline per step
_MAX_COL_BLOCK = 512           # output-column block (multiple of 256 for v6e/v7x MXU)
_PALLAS_MIN_ELEMS = 1 << 17    # below this, fused XLA beats pallas_call fixed overhead


def _round_up(x, m):
    return -(-x // m) * m


def _imputer_kernel(x_ref, w_ref, b_ref, o_ref):
    # x_ref: (TM, K)   batch tile (pipelined / double-buffered over the inner grid axis)
    # w_ref: (K, TN)   pre-transposed weight column block (changes only on the outer axis)
    # b_ref: (1, TN)
    # o_ref: (TM, TN)
    z = jnp.dot(x_ref[...], w_ref[...], preferred_element_type=jnp.float32)  # MXU
    z = z + b_ref[...]                                                        # VPU
    o_ref[...] = jax.nn.sigmoid(z).astype(o_ref.dtype)                        # EUP


def _spec(block_shape, index_map, single_buffer):
    if single_buffer:
        # Grid-invariant operand: one VMEM buffer instead of the default two.
        return pl.BlockSpec(block_shape, index_map, pipeline_mode=pl.Buffered(1))
    return pl.BlockSpec(block_shape, index_map)


def _build_call(B, K, N, tm, tn, grid_n, grid_m, dtype,
                single_buffer_invariant, vmem_limit_bytes, cost):
    # Grid order (columns, batch): the batch axis is innermost, so the weight/bias block
    # changes only on the (rare) outer-axis step and is never re-fetched per batch tile.
    invariant = single_buffer_invariant and grid_n == 1
    return pl.pallas_call(
        _imputer_kernel,
        out_shape=jax.ShapeDtypeStruct((B, N), dtype),
        grid=(grid_n, grid_m),
        in_specs=[
            pl.BlockSpec((tm, K), lambda j, i: (i, 0)),        # data: streamed over batch
            _spec((K, tn), lambda j, i: (0, j), invariant),    # weight (pre-transposed)
            _spec((1, tn), lambda j, i: (0, j), invariant),    # bias
        ],
        out_specs=pl.BlockSpec((tm, tn), lambda j, i: (i, j)),
        compiler_params=pltpu.CompilerParams(
            # Every (j, i) block is independent.
            # TODO(synk): on v7x use pltpu.CORE_PARALLEL on the batch axis to guarantee
            # both TensorCores are used; plain "parallel" kept here for portability.
            dimension_semantics=("parallel", "parallel"),
            vmem_limit_bytes=vmem_limit_bytes,
        ),
        cost_estimate=cost,
    )


def simple_imputer_forward(data, m, weight, bias, *, block_rows=None, use_pallas=None):
    """sigmoid(data @ weight.T + bias).

    data:   [B, D_in]  float32
    m:      [B, D_in]  mask -- accepted (matches the PyTorch signature) but never read.
    weight: [D_out, D_in]  (nn.Linear layout)
    bias:   [D_out]
    """
    del m  # Simple_imputer.forward never reads it; do NOT stream it through the kernel.

    B, D_in = data.shape
    D_out, D_in_w = weight.shape
    assert D_in_w == D_in, "weight in_features must match data features"

    if use_pallas is None:
        use_pallas = B * max(D_in, D_out) >= _PALLAS_MIN_ELEMS
    if not use_pallas:
        # Tiny problems: one fused XLA op beats the fixed pallas_call + pad/slice overhead.
        return jax.nn.sigmoid(data @ weight.T + bias)

    # --- K (contraction) axis: zero-pad to a 128 multiple only when large and misaligned.
    # Zero columns contribute nothing to the dot, so this is exact.
    if D_in % 128 != 0 and D_in >= 256:
        K = _round_up(D_in, 128)
        data = jnp.pad(data, ((0, 0), (0, K - D_in)))
        weight = jnp.pad(weight, ((0, 0), (0, K - D_in)))
    else:
        K = D_in

    # --- N (output feature) axis: lane-pad to a 128 multiple only when write amplification
    # is small (< ~10%). Otherwise keep the native width: masked stores are far cheaper
    # than several-x extra output traffic plus an epilogue slice pass.
    N_pad = _round_up(D_out, 128)
    if N_pad != D_out and N_pad <= 1.1 * D_out:
        weight = jnp.pad(weight, ((0, N_pad - D_out), (0, 0)))
        bias = jnp.pad(bias, (0, N_pad - D_out))
        N = N_pad
    else:
        N = D_out

    # Transpose the weight ONCE in the wrapper (single K*N*4-byte pass) so the kernel's
    # dot contracts K against the RHS leading axis -- no per-grid-step XLU transpose.
    w_t = jnp.asarray(weight).T            # (K, N)
    bias2d = jnp.asarray(bias).reshape(1, N)

    # --- tile sizes ---
    tn = N if N <= _MAX_COL_BLOCK else _MAX_COL_BLOCK
    grid_n = pl.cdiv(N, tn)

    if block_rows is not None:
        tm = _round_up(block_rows, 8)
    else:
        row_bytes = 4 * max(K, N)
        tm = max(8, (_TARGET_TILE_BYTES // row_bytes) // 8 * 8)
    tm = min(tm, _round_up(B, 8))
    grid_m = pl.cdiv(B, tm)

    # VMEM budget from the tile math (conservative: everything double-buffered) + headroom.
    need = 4 * (2 * tm * K + 2 * K * tn + 2 * tn + 2 * tm * tn)
    vmem_limit = int(min(max(2 * need + (2 << 20), 16 << 20), 64 << 20))

    cost = pl.CostEstimate(
        flops=2 * B * K * N,
        transcendentals=B * N,
        bytes_accessed=4 * (B * K + K * N + N + B * N),
    )

    args = (data, w_t, bias2d)
    try:
        out = _build_call(B, K, N, tm, tn, grid_n, grid_m, data.dtype,
                          True, vmem_limit, cost)(*args)
    except Exception:
        # pl.Buffered(1) not honored on this jax/libtpu combo -> default double buffering.
        out = _build_call(B, K, N, tm, tn, grid_n, grid_m, data.dtype,
                          False, vmem_limit, cost)(*args)

    if N != D_out:
        out = out[:, :D_out]
    return out


if __name__ == "__main__":
    key = jax.random.PRNGKey(0)
    k_data, k_m, k_w, k_b = jax.random.split(key, 4)

    def ref_fn(d, w, b):
        return jax.nn.sigmoid(d @ w.T + b)

    # 1) Module-native small shape (batch=8, dim=32), forced through the Pallas path.
    B, D = 8, 32
    data = jax.random.normal(k_data, (B, D), dtype=jnp.float32)
    m = (jax.random.uniform(k_m, (B, D)) > 0.5).astype(jnp.float32)
    bound = 1.0 / (D ** 0.5)
    weight = jax.random.uniform(k_w, (D, D), minval=-bound, maxval=bound, dtype=jnp.float32)
    bias = jax.random.uniform(k_b, (D,), minval=-bound, maxval=bound, dtype=jnp.float32)

    out = jax.block_until_ready(
        simple_imputer_forward(data, m, weight, bias, use_pallas=True))
    assert out.shape == (B, D)
    assert jnp.allclose(out, ref_fn(data, weight, bias), atol=1e-5, rtol=1e-5)

    # 2) Ragged, multi-tile batch (exercises the cdiv grid + masked last tile).
    B2 = 50
    data2 = jax.random.normal(jax.random.PRNGKey(1), (B2, D), dtype=jnp.float32)
    m2 = jnp.zeros((B2, D), jnp.float32)
    out2 = jax.block_until_ready(
        simple_imputer_forward(data2, m2, weight, bias, block_rows=16, use_pallas=True))
    assert out2.shape == (B2, D)
    assert jnp.allclose(out2, ref_fn(data2, weight, bias), atol=1e-5, rtol=1e-5)

    # 3) Non-128 feature dim with a small pad remainder (exercises the lane-padded path).
    D3, B3 = 120, 24
    kw3, kb3, kd3 = jax.random.split(jax.random.PRNGKey(2), 3)
    bound3 = 1.0 / (D3 ** 0.5)
    w3 = jax.random.uniform(kw3, (D3, D3), minval=-bound3, maxval=bound3, dtype=jnp.float32)
    b3 = jax.random.uniform(kb3, (D3,), minval=-bound3, maxval=bound3, dtype=jnp.float32)
    d3 = jax.random.normal(kd3, (B3, D3), dtype=jnp.float32)
    m3 = jnp.zeros((B3, D3), jnp.float32)
    out3 = jax.block_until_ready(
        simple_imputer_forward(d3, m3, w3, b3, use_pallas=True))
    assert out3.shape == (B3, D3)
    assert jnp.allclose(out3, ref_fn(d3, w3, b3), atol=1e-5, rtol=1e-5)

    print("KERNEL_OK")
</pallas_src>

<mosaic_0001>
module attributes {stable_mosaic.version = 11 : i64} {
  func.func @_imputer_kernel(%arg0: i32, %arg1: i32, %arg2: memref<8x32xf32, #tpu.memory_space<vmem>>, %arg3: memref<32x32xf32, #tpu.memory_space<vmem>>, %arg4: memref<1x32xf32, #tpu.memory_space<vmem>>, %arg5: memref<8x32xf32, #tpu.memory_space<vmem>>) attributes {dimension_semantics = [#tpu.dimension_semantics<parallel>, #tpu.dimension_semantics<parallel>], iteration_bounds = array<i64: 1, 1>, scalar_prefetch = 0 : i64, scratch_operands = 0 : i64, tpu.core_type = #tpu.core_type<tc>, window_params = [{transform_indices = @transform_0, window_bounds = array<i64: 8, 32>}, {pipeline_mode = #tpu.pipeline_mode<synchronous>, transform_indices = @transform_1, window_bounds = array<i64: 32, 32>}, {pipeline_mode = #tpu.pipeline_mode<synchronous>, transform_indices = @transform_2, window_bounds = array<i64: 1, 32>}, {transform_indices = @transform_3, window_bounds = array<i64: 8, 32>}]} {
    %c0 = arith.constant 0 : index
    %c0_0 = arith.constant 0 : index
    %0 = vector.load %arg2[%c0, %c0_0] : memref<8x32xf32, #tpu.memory_space<vmem>>, vector<8x32xf32>
    %c0_1 = arith.constant 0 : index
    %c0_2 = arith.constant 0 : index
    %1 = vector.load %arg3[%c0_1, %c0_2] : memref<32x32xf32, #tpu.memory_space<vmem>>, vector<32x32xf32>
    %cst = arith.constant dense<0.000000e+00> : vector<8x32xf32>
    %2 = tpu.matmul %0, %1, %cst {dimension_numbers = #tpu.dot_dimension_numbers<[1], [0], [0], [1], [0, 0, 1, 1], [], []>} : vector<8x32xf32>, vector<32x32xf32>, vector<8x32xf32> -> vector<8x32xf32>
    %c0_3 = arith.constant 0 : index
    %c0_4 = arith.constant 0 : index
    %3 = vector.load %arg4[%c0_3, %c0_4] : memref<1x32xf32, #tpu.memory_space<vmem>>, vector<1x32xf32>
    %4 = vector.broadcast %3 : vector<1x32xf32> to vector<8x32xf32>
    %5 = arith.addf %2, %4 : vector<8x32xf32>
    %6 = arith.negf %5 : vector<8x32xf32>
    %7 = math.exp %6 : vector<8x32xf32>
    %cst_5 = arith.constant 1.000000e+00 : f32
    %8 = vector.broadcast %cst_5 : f32 to vector<8x32xf32>
    %9 = arith.addf %8, %7 : vector<8x32xf32>
    %10 = arith.divf %8, %9 : vector<8x32xf32>
    %c0_6 = arith.constant 0 : index
    %c0_7 = arith.constant 0 : index
    %11 = vector.load %arg5[%c0_6, %c0_7] : memref<8x32xf32, #tpu.memory_space<vmem>>, vector<8x32xf32>
    tpu.vector_store %arg5[%c0_6, %c0_7], %10 {strides = array<i32>} : memref<8x32xf32, #tpu.memory_space<vmem>>, vector<8x32xf32>,
    return
  }
  func.func @transform_0(%arg0: i32, %arg1: i32) -> (i32, i32) {
    %c0_i32 = arith.constant 0 : i32
    %c0_i32_0 = arith.constant 0 : i32
    return %arg1, %c0_i32 : i32, i32
  }
  func.func @transform_1(%arg0: i32, %arg1: i32) -> (i32, i32) {
    %c0_i32 = arith.constant 0 : i32
    %c0_i32_0 = arith.constant 0 : i32
    return %c0_i32, %arg0 : i32, i32
  }
  func.func @transform_2(%arg0: i32, %arg1: i32) -> (i32, i32) {
    %c0_i32 = arith.constant 0 : i32
    %c0_i32_0 = arith.constant 0 : i32
    return %c0_i32, %arg0 : i32, i32
  }
  func.func @transform_3(%arg0: i32, %arg1: i32) -> (i32, i32) {
    %c0_i32 = arith.constant 0 : i32
    return %arg1, %arg0 : i32, i32
  }
}

module attributes {stable_mosaic.version = 11 : i64} {
  func.func @_imputer_kernel(%arg0: i32, %arg1: i32, %arg2: memref<8x32xf32, #tpu.memory_space<vmem>>, %arg3: memref<32x32xf32, #tpu.memory_space<vmem>>, %arg4: memref<1x32xf32, #tpu.memory_space<vmem>>, %arg5: memref<8x32xf32, #tpu.memory_space<vmem>>) attributes {dimension_semantics = [#tpu.dimension_semantics<parallel>, #tpu.dimension_semantics<parallel>], iteration_bounds = array<i64: 1, 1>, scalar_prefetch = 0 : i64, scratch_operands = 0 : i64, tpu.core_type = #tpu.core_type<tc>, window_params = [{transform_indices = @transform_0, window_bounds = array<i64: 8, 32>}, {transform_indices = @transform_1, window_bounds = array<i64: 32, 32>}, {transform_indices = @transform_2, window_bounds = array<i64: 1, 32>}, {transform_indices = @transform_3, window_bounds = array<i64: 8, 32>}]} {
    %c0 = arith.constant 0 : index
    %c0_0 = arith.constant 0 : index
    %0 = vector.load %arg2[%c0, %c0_0] : memref<8x32xf32, #tpu.memory_space<vmem>>, vector<8x32xf32>
    %c0_1 = arith.constant 0 : index
    %c0_2 = arith.constant 0 : index
    %1 = vector.load %arg3[%c0_1, %c0_2] : memref<32x32xf32, #tpu.memory_space<vmem>>, vector<32x32xf32>
    %cst = arith.constant dense<0.000000e+00> : vector<8x32xf32>
    %2 = tpu.matmul %0, %1, %cst {dimension_numbers = #tpu.dot_dimension_numbers<[1], [0], [0], [1], [0, 0, 1, 1], [], []>} : vector<8x32xf32>, vector<32x32xf32>, vector<8x32xf32> -> vector<8x32xf32>
    %c0_3 = arith.constant 0 : index
    %c0_4 = arith.constant 0 : index
    %3 = vector.load %arg4[%c0_3, %c0_4] : memref<1x32xf32, #tpu.memory_space<vmem>>, vector<1x32xf32>
    %4 = vector.broadcast %3 : vector<1x32xf32> to vector<8x32xf32>
    %5 = arith.addf %2, %4 : vector<8x32xf32>
    %6 = arith.negf %5 : vector<8x32xf32>
    %7 = math.exp %6 : vector<8x32xf32>
    %cst_5 = arith.constant 1.000000e+00 : f32
    %8 = vector.broadcast %cst_5 : f32 to vector<8x32xf32>
    %9 = arith.addf %8, %7 : vector<8x32xf32>
    %10 = arith.divf %8, %9 : vector<8x32xf32>
    %c0_6 = arith.constant 0 : index
    %c0_7 = arith.constant 0 : index
    %11 = vector.load %arg5[%c0_6, %c0_7] : memref<8x32xf32, #tpu.memory_space<vmem>>, vector<8x32xf32>
    tpu.vector_store %arg5[%c0_6, %c0_7], %10 {strides = array<i32>} : memref<8x32xf32, #tpu.memory_space<vmem>>, vector<8x32xf32>,
    return
  }
  func.func @transform_0(%arg0: i32, %arg1: i32) -> (i32, i32) {
    %c0_i32 = arith.constant 0 : i32
    %c0_i32_0 = arith.constant 0 : i32
    return %arg1, %c0_i32 : i32, i32
  }
  func.func @transform_1(%arg0: i32, %arg1: i32) -> (i32, i32) {
    %c0_i32 = arith.constant 0 : i32
    %c0_i32_0 = arith.constant 0 : i32
    return %c0_i32, %arg0 : i32, i32
  }
  func.func @transform_2(%arg0: i32, %arg1: i32) -> (i32, i32) {
    %c0_i32 = arith.constant 0 : i32
    %c0_i32_0 = arith.constant 0 : i32
    return %c0_i32, %arg0 : i32, i32
  }
  func.func @transform_3(%arg0: i32, %arg1: i32) -> (i32, i32) {
    %c0_i32 = arith.constant 0 : i32
    return %arg1, %arg0 : i32, i32
  }
}

</mosaic_0001>

<llo_original>
// kernel: tpu_custom_call.1
$region0: #{tpu_custom_call.1}
  #allocation0 [shape = 'u32[]', space=smem, size = 0x4, offset = 0x4, fixed_abs, tag = 'smem constant byte address 0x4 - core index']
  #allocation1 [shape = 'u32[144,128]{1,0:T(1,128)}', space=vmem, size = 0x12000, scoped, tag = 'internal scratch']
  %s0 = inlined_call_operand.hbm [shape: f32[8,32], index: 0, kind: input, shape index: {}]
  %s1 = inlined_call_operand.hbm [shape: f32[32,32], index: 1, kind: input, shape index: {}]
  %s2 = inlined_call_operand.vmem [shape: f32[1,32], index: 2, kind: input, shape index: {}]
  %s3 = inlined_call_operand.hbm [shape: f32[8,32], index: 3, kind: output, shape index: {}]
  %s4 = sld [smem:[#allocation0]]
  $region30: #{tpu_custom_call.1} parent=0
    _
  %s6 = ssub.s32 1, %s4
  %s7 = scalar_select 0, %s6, %s4
  $region1: #{tpu_custom_call.1} parent=0
    #allocation2 [shape = 'u8[4096]{0}', space=vmem, size = 0x1000, scoped, tag = 'input window, operand 0, single buffered']
    #allocation3 [shape = 's32[1]{0}', space=sflag, size = 0x4, scoped, tag = 'scoped memory for tpu_custom_call.1']
    #allocation4 [shape = 's32[1]{0}', space=sflag, size = 0x4, scoped, tag = 'scoped memory for tpu_custom_call.1']
    #allocation5 [shape = 'u8[16384]{0}', space=vmem, size = 0x4000, scoped, tag = 'input window, operand 1, single buffered']
    #allocation6 [shape = 's32[1]{0}', space=sflag, size = 0x4, scoped, tag = 'scoped memory for tpu_custom_call.1']
    #allocation7 [shape = 'u8[4096]{0}', space=vmem, size = 0x1000, scoped, tag = 'output window, operand 0, single buffered']
    %8 = vsyncpa [#allocation3], 0
    %9 = vsyncpa [#allocation6], 0
    %10 = vsyncpa [#allocation4], 0
    // Predicated region
    $region2: #{tpu_custom_call.1} parent=1 // pred_check
      _
    $region3: #{tpu_custom_call.1} parent=1 // pred_check_branch
      %12 = sbr.rel (0) target = $region5
    $region4: #{tpu_custom_call.1} parent=1 // pred_region
      %s14 = ssub.s32 128, 128
      %15 = vsyncadd [#allocation3], %s14
      %s17 = sshll.u32 [#allocation2], 4
      %s18 = int_to_ptr.vmem [resolvable:$true] %s17
      %20 = dma.hbm_to_vmem [thread:$0]  %s0, 128, %s18, [#allocation3]
    $region5: #{tpu_custom_call.1} parent=1 // pred_fallthru
      _
    // Predicated region
    $region6: #{tpu_custom_call.1} parent=1 // pred_check
      _
    $region7: #{tpu_custom_call.1} parent=1 // pred_check_branch
      %22 = sbr.rel (0) target = $region9
    $region8: #{tpu_custom_call.1} parent=1 // pred_region
      %s24 = ssub.s32 512, 512
      %25 = vsyncadd [#allocation6], %s24
      %s26 = sshll.u32 [#allocation5], 4
      %s27 = int_to_ptr.vmem [resolvable:$true] %s26
      %32 = dma.hbm_to_vmem [thread:$0]  %s1, 512, %s27, [#allocation6], 128, 128, 8
    $region9: #{tpu_custom_call.1} parent=1 // pred_fallthru
      _
    // Predicated region
    $region10: #{tpu_custom_call.1} parent=1 // pred_check
      _
    $region11: #{tpu_custom_call.1} parent=1 // pred_check_branch
      %34 = sbr.rel (0) target = $region13
    $region12: #{tpu_custom_call.1} parent=1 // pred_region
      _
    $region13: #{tpu_custom_call.1} parent=1 // pred_fallthru
      _
    // Predicated region
    $region14: #{tpu_custom_call.1} parent=1 // pred_check
      _
    $region15: #{tpu_custom_call.1} parent=1 // pred_check_branch
      %36 = sbr.rel (0) target = $region17
    $region16: #{tpu_custom_call.1} parent=1 // pred_region
      %37 = dma.done [#allocation3], 128
    $region17: #{tpu_custom_call.1} parent=1 // pred_fallthru
      _
    // Predicated region
    $region18: #{tpu_custom_call.1} parent=1 // pred_check
      _
    $region19: #{tpu_custom_call.1} parent=1 // pred_check_branch
      %39 = sbr.rel (0) target = $region21
    $region20: #{tpu_custom_call.1} parent=1 // pred_region
      %40 = dma.done [#allocation6], 512
    $region21: #{tpu_custom_call.1} parent=1 // pred_fallthru
      _
    %v41 = vld [vmem:[#allocation2] sm:$0xff]
    %v42 = vld [vmem:[#allocation5] sm:$0xff]
    %v43 = vld [vmem:[#allocation5 + $0x8] sm:$0xff]
    %v44 = vld [vmem:[#allocation5 + $0x10] sm:$0xff]
    %v45 = vld [vmem:[#allocation5 + $0x18] sm:$0xff]
    %v46 = vld [vmem:[%s2] sm:$0x1]
    %v48 = vlaneseq
    %v49 = vshrl.u32 %v48, 7
    %v50 = vsub.s32 0, %v49
    %v51 = vrot.slane %v46, %v50
    %vm53 = vcmask 261120
    %v55 = vsel %vm53, %v41, 0
    %57 = vmatprep.subr.mxu0 0.0
    %58 = vmatpush1.msra.mxu0 %v42
    %59 = vmatprep.subr.mxu0 0.0
    %60 = vmatpush1.msra.mxu0 %v43
    %61 = vmatprep.subr.mxu0 0.0
    %62 = vmatpush1.msra.mxu0 %v44
    %63 = vmatprep.subr.mxu0 0.0
    %64 = vmatpush1.msra.mxu0 %v45
    %65 = vmatprep.subr.mxu0 0.0
    %66 = vmatpush1.msra.mxu0 0.0
    %67 = vmatprep.subr.mxu0 0.0
    %68 = vmatpush1.msra.mxu0 0.0
    %69 = vmatprep.subr.mxu0 0.0
    %70 = vmatpush1.msra.mxu0 0.0
    %71 = vmatprep.subr.mxu0 0.0
    %72 = vmatpush1.msra.mxu0 0.0
    %73 = vmatprep.subr.mxu0 0.0
    %74 = vmatpush1.msra.mxu0 0.0
    %75 = vmatprep.subr.mxu0 0.0
    %76 = vmatpush1.msra.mxu0 0.0
    %77 = vmatprep.subr.mxu0 0.0
    %78 = vmatpush1.msra.mxu0 0.0
    %79 = vmatprep.subr.mxu0 0.0
    %80 = vmatpush1.msra.mxu0 0.0
    %81 = vmatprep.subr.mxu0 0.0
    %82 = vmatpush1.msra.mxu0 0.0
    %83 = vmatprep.subr.mxu0 0.0
    %84 = vmatpush1.msra.mxu0 0.0
    %85 = vmatprep.subr.mxu0 0.0
    %86 = vmatpush1.msra.mxu0 0.0
    %87 = vmatprep.subr.mxu0 0.0
    %88 = vmatpush1.msra.mxu0 0.0
    %89 = vmatprep.subr.mxu0 0.0
    %90 = vmatpush1.msra.mxu0 0.0
    %91 = vmatprep.subr.mxu0 0.0
    %92 = vmatpush1.msra.mxu0 0.0
    %93 = vmatprep.subr.mxu0 0.0
    %94 = vmatpush1.msra.mxu0 0.0
    %95 = vmatprep.subr.mxu0 0.0
    %96 = vmatpush1.msra.mxu0 0.0
    %97 = vmatprep.subr.mxu0 0.0
    %98 = vmatpush1.msra.mxu0 0.0
    %99 = vmatprep.subr.mxu0 0.0
    %100 = vmatpush1.msra.mxu0 0.0
    %101 = vmatprep.subr.mxu0 0.0
    %102 = vmatpush1.msra.mxu0 0.0
    %103 = vmatprep.subr.mxu0 0.0
    %104 = vmatpush1.msra.mxu0 0.0
    %105 = vmatprep.subr.mxu0 0.0
    %106 = vmatpush1.msra.mxu0 0.0
    %107 = vmatprep.subr.mxu0 0.0
    %108 = vmatpush1.msra.mxu0 0.0
    %109 = vmatprep.subr.mxu0 0.0
    %110 = vmatpush1.msra.mxu0 0.0
    %111 = vmatprep.subr.mxu0 0.0
    %112 = vmatpush1.msra.mxu0 0.0
    %113 = vmatprep.subr.mxu0 0.0
    %114 = vmatpush1.msra.mxu0 0.0
    %115 = vmatprep.subr.mxu0 0.0
    %116 = vmatpush1.msra.mxu0 0.0
    %117 = vmatprep.subr.mxu0 0.0
    %118 = vmatpush1.msra.mxu0 0.0
    %119 = vmatprep.subr.mxu0 0.0
    %120 = vmatpush1.msra.mxu0 0.0
    %121 = vmatprep.mubr.f32.mxu0 0.0
    %122 = vmatmul.mubr.f32.gmra.mrb[0].mxu0 %v55
    %v123 = vpop.f32.mrb[0].mxu0
    %v124 = vadd.f32 %v51, %v123
    %v125 = vpop.f32.mrb[0].mxu0
    %126 = vdwg.mxu0
    %v127 = vxor.u32 %v124, 2147483648
    %v128 = vmul.f32 %v127, 1.442695
    %v129 = vpow.pop %v128
    %v130 = vadd.f32 %v129, 1.0
    %v131 = vrcp.pop %v130
    %v132 = vmul.f32 1.0, %v131
    %133 = vst.msk [vmem:[#allocation7] sm:$0xff] %vm53, %v132
    // Predicated region
    $region22: #{tpu_custom_call.1} parent=1 // pred_check
      _
    $region23: #{tpu_custom_call.1} parent=1 // pred_check_branch
      %135 = sbr.rel (0) target = $region25
    $region24: #{tpu_custom_call.1} parent=1 // pred_region
      %s137 = ssub.s32 128, 128
      %138 = vsyncadd [#allocation4], %s137
      %s140 = sshll.u32 [#allocation7], 4
      %s141 = int_to_ptr.vmem [resolvable:$true] %s140
      %143 = dma.vmem_to_hbm [thread:$0]  %s141, 128, %s3, [#allocation4]
    $region25: #{tpu_custom_call.1} parent=1 // pred_fallthru
      _
    // Predicated region
    $region26: #{tpu_custom_call.1} parent=1 // pred_check
      _
    $region27: #{tpu_custom_call.1} parent=1 // pred_check_branch
      %145 = sbr.rel (0) target = $region29
    $region28: #{tpu_custom_call.1} parent=1 // pred_region
      %146 = dma.done [#allocation4], 128
    $region29: #{tpu_custom_call.1} parent=1 // pred_fallthru
      _
    %147 = vsyncpa [#allocation3], 1
    %148 = vsyncpa [#allocation6], 1
    %149 = vsyncpa [#allocation4], 1

// kernel: tpu_custom_call.1
$region0: #{tpu_custom_call.1}
  #allocation0 [shape = 'u32[]', space=smem, size = 0x4, offset = 0x4, fixed_abs, tag = 'smem constant byte address 0x4 - core index']
  #allocation1 [shape = 'u32[144,128]{1,0:T(1,128)}', space=vmem, size = 0x12000, scoped, tag = 'internal scratch']
  %s0 = inlined_call_operand.hbm [shape: f32[8,32], index: 0, kind: input, shape index: {}]
  %s1 = inlined_call_operand.hbm [shape: f32[32,32], index: 1, kind: input, shape index: {}]
  %s2 = inlined_call_operand.vmem [shape: f32[1,32], index: 2, kind: input, shape index: {}]
  %s3 = inlined_call_operand.hbm [shape: f32[8,32], index: 3, kind: output, shape index: {}]
  %s4 = sld [smem:[#allocation0]]
  $region30: #{tpu_custom_call.1} parent=0
    _
  %s6 = ssub.s32 1, %s4
  %s7 = scalar_select 0, %s6, %s4
  $region1: #{tpu_custom_call.1} parent=0
    #allocation2 [shape = 'u8[4096]{0}', space=vmem, size = 0x1000, scoped, tag = 'input window, operand 0, single buffered']
    #allocation3 [shape = 's32[1]{0}', space=sflag, size = 0x4, scoped, tag = 'scoped memory for tpu_custom_call.1']
    #allocation4 [shape = 's32[1]{0}', space=sflag, size = 0x4, scoped, tag = 'scoped memory for tpu_custom_call.1']
    #allocation5 [shape = 'u8[16384]{0}', space=vmem, size = 0x4000, scoped, tag = 'input window, operand 1, single buffered']
    #allocation6 [shape = 's32[1]{0}', space=sflag, size = 0x4, scoped, tag = 'scoped memory for tpu_custom_call.1']
    #allocation7 [shape = 'u8[4096]{0}', space=vmem, size = 0x1000, scoped, tag = 'output window, operand 0, single buffered']
    %8 = vsyncpa [#allocation3], 0
    %9 = vsyncpa [#allocation6], 0
    %10 = vsyncpa [#allocation4], 0
    // Predicated region
    $region2: #{tpu_custom_call.1} parent=1 // pred_check
      _
    $region3: #{tpu_custom_call.1} parent=1 // pred_check_branch
      %12 = sbr.rel (0) target = $region5
    $region4: #{tpu_custom_call.1} parent=1 // pred_region
      %s14 = ssub.s32 128, 128
      %15 = vsyncadd [#allocation3], %s14
      %s17 = sshll.u32 [#allocation2], 4
      %s18 = int_to_ptr.vmem [resolvable:$true] %s17
      %20 = dma.hbm_to_vmem [thread:$0]  %s0, 128, %s18, [#allocation3]
    $region5: #{tpu_custom_call.1} parent=1 // pred_fallthru
      _
    // Predicated region
    $region6: #{tpu_custom_call.1} parent=1 // pred_check
      _
    $region7: #{tpu_custom_call.1} parent=1 // pred_check_branch
      %22 = sbr.rel (0) target = $region9
    $region8: #{tpu_custom_call.1} parent=1 // pred_region
      %s24 = ssub.s32 512, 512
      %25 = vsyncadd [#allocation6], %s24
      %s26 = sshll.u32 [#allocation5], 4
      %s27 = int_to_ptr.vmem [resolvable:$true] %s26
      %32 = dma.hbm_to_vmem [thread:$0]  %s1, 512, %s27, [#allocation6], 128, 128, 8
    $region9: #{tpu_custom_call.1} parent=1 // pred_fallthru
      _
    // Predicated region
    $region10: #{tpu_custom_call.1} parent=1 // pred_check
      _
    $region11: #{tpu_custom_call.1} parent=1 // pred_check_branch
      %34 = sbr.rel (0) target = $region13
    $region12: #{tpu_custom_call.1} parent=1 // pred_region
      _
    $region13: #{tpu_custom_call.1} parent=1 // pred_fallthru
      _
    // Predicated region
    $region14: #{tpu_custom_call.1} parent=1 // pred_check
      _
    $region15: #{tpu_custom_call.1} parent=1 // pred_check_branch
      %36 = sbr.rel (0) target = $region17
    $region16: #{tpu_custom_call.1} parent=1 // pred_region
      %37 = dma.done [#allocation3], 128
    $region17: #{tpu_custom_call.1} parent=1 // pred_fallthru
      _
    // Predicated region
    $region18: #{tpu_custom_call.1} parent=1 // pred_check
      _
    $region19: #{tpu_custom_call.1} parent=1 // pred_check_branch
      %39 = sbr.rel (0) target = $region21
    $region20: #{tpu_custom_call.1} parent=1 // pred_region
      %40 = dma.done [#allocation6], 512
    $region21: #{tpu_custom_call.1} parent=1 // pred_fallthru
      _
    %v41 = vld [vmem:[#allocation2] sm:$0xff]
    %v42 = vld [vmem:[#allocation5] sm:$0xff]
    %v43 = vld [vmem:[#allocation5 + $0x8] sm:$0xff]
    %v44 = vld [vmem:[#allocation5 + $0x10] sm:$0xff]
    %v45 = vld [vmem:[#allocation5 + $0x18] sm:$0xff]
    %v46 = vld [vmem:[%s2] sm:$0x1]
    %v48 = vlaneseq
    %v49 = vshrl.u32 %v48, 7
    %v50 = vsub.s32 0, %v49
    %v51 = vrot.slane %v46, %v50
    %vm53 = vcmask 261120
    %v55 = vsel %vm53, %v41, 0
    %57 = vmatprep.subr.mxu0 0.0
    %58 = vmatpush1.msra.mxu0 %v42
    %59 = vmatprep.subr.mxu0 0.0
    %60 = vmatpush1.msra.mxu0 %v43
    %61 = vmatprep.subr.mxu0 0.0
    %62 = vmatpush1.msra.mxu0 %v44
    %63 = vmatprep.subr.mxu0 0.0
    %64 = vmatpush1.msra.mxu0 %v45
    %65 = vmatprep.subr.mxu0 0.0
    %66 = vmatpush1.msra.mxu0 0.0
    %67 = vmatprep.subr.mxu0 0.0
    %68 = vmatpush1.msra.mxu0 0.0
    %69 = vmatprep.subr.mxu0 0.0
    %70 = vmatpush1.msra.mxu0 0.0
    %71 = vmatprep.subr.mxu0 0.0
    %72 = vmatpush1.msra.mxu0 0.0
    %73 = vmatprep.subr.mxu0 0.0
    %74 = vmatpush1.msra.mxu0 0.0
    %75 = vmatprep.subr.mxu0 0.0
    %76 = vmatpush1.msra.mxu0 0.0
    %77 = vmatprep.subr.mxu0 0.0
    %78 = vmatpush1.msra.mxu0 0.0
    %79 = vmatprep.subr.mxu0 0.0
    %80 = vmatpush1.msra.mxu0 0.0
    %81 = vmatprep.subr.mxu0 0.0
    %82 = vmatpush1.msra.mxu0 0.0
    %83 = vmatprep.subr.mxu0 0.0
    %84 = vmatpush1.msra.mxu0 0.0
    %85 = vmatprep.subr.mxu0 0.0
    %86 = vmatpush1.msra.mxu0 0.0
    %87 = vmatprep.subr.mxu0 0.0
    %88 = vmatpush1.msra.mxu0 0.0
    %89 = vmatprep.subr.mxu0 0.0
    %90 = vmatpush1.msra.mxu0 0.0
    %91 = vmatprep.subr.mxu0 0.0
    %92 = vmatpush1.msra.mxu0 0.0
    %93 = vmatprep.subr.mxu0 0.0
    %94 = vmatpush1.msra.mxu0 0.0
    %95 = vmatprep.subr.mxu0 0.0
    %96 = vmatpush1.msra.mxu0 0.0
    %97 = vmatprep.subr.mxu0 0.0
    %98 = vmatpush1.msra.mxu0 0.0
    %99 = vmatprep.subr.mxu0 0.0
    %100 = vmatpush1.msra.mxu0 0.0
    %101 = vmatprep.subr.mxu0 0.0
    %102 = vmatpush1.msra.mxu0 0.0
    %103 = vmatprep.subr.mxu0 0.0
    %104 = vmatpush1.msra.mxu0 0.0
    %105 = vmatprep.subr.mxu0 0.0
    %106 = vmatpush1.msra.mxu0 0.0
    %107 = vmatprep.subr.mxu0 0.0
    %108 = vmatpush1.msra.mxu0 0.0
    %109 = vmatprep.subr.mxu0 0.0
    %110 = vmatpush1.msra.mxu0 0.0
    %111 = vmatprep.subr.mxu0 0.0
    %112 = vmatpush1.msra.mxu0 0.0
    %113 = vmatprep.subr.mxu0 0.0
    %114 = vmatpush1.msra.mxu0 0.0
    %115 = vmatprep.subr.mxu0 0.0
    %116 = vmatpush1.msra.mxu0 0.0
    %117 = vmatprep.subr.mxu0 0.0
    %118 = vmatpush1.msra.mxu0 0.0
    %119 = vmatprep.subr.mxu0 0.0
    %120 = vmatpush1.msra.mxu0 0.0
    %121 = vmatprep.mubr.f32.mxu0 0.0
    %122 = vmatmul.mubr.f32.gmra.mrb[0].mxu0 %v55
    %v123 = vpop.f32.mrb[0].mxu0
    %v124 = vadd.f32 %v51, %v123
    %v125 = vpop.f32.mrb[0].mxu0
    %126 = vdwg.mxu0
    %v127 = vxor.u32 %v124, 2147483648
    %v128 = vmul.f32 %v127, 1.442695
    %v129 = vpow.pop %v128
    %v130 = vadd.f32 %v129, 1.0
    %v131 = vrcp.pop %v130
    %v132 = vmul.f32 1.0, %v131
    %133 = vst.msk [vmem:[#allocation7] sm:$0xff] %vm53, %v132
    // Predicated region
    $region22: #{tpu_custom_call.1} parent=1 // pred_check
      _
    $region23: #{tpu_custom_call.1} parent=1 // pred_check_branch
      %135 = sbr.rel (0) target = $region25
    $region24: #{tpu_custom_call.1} parent=1 // pred_region
      %s137 = ssub.s32 128, 128
      %138 = vsyncadd [#allocation4], %s137
      %s140 = sshll.u32 [#allocation7], 4
      %s141 = int_to_ptr.vmem [resolvable:$true] %s140
      %143 = dma.vmem_to_hbm [thread:$0]  %s141, 128, %s3, [#allocation4]
    $region25: #{tpu_custom_call.1} parent=1 // pred_fallthru
      _
    // Predicated region
    $region26: #{tpu_custom_call.1} parent=1 // pred_check
      _
    $region27: #{tpu_custom_call.1} parent=1 // pred_check_branch
      %145 = sbr.rel (0) target = $region29
    $region28: #{tpu_custom_call.1} parent=1 // pred_region
      %146 = dma.done [#allocation4], 128
    $region29: #{tpu_custom_call.1} parent=1 // pred_fallthru
      _
    %147 = vsyncpa [#allocation3], 1
    %148 = vsyncpa [#allocation6], 1
    %149 = vsyncpa [#allocation4], 1

</llo_original>
